<compile_context>
chip_gen: v5e
topology: v5e:2x2
jax: 0.10.0
libtpu: 0.0.40
codegen_flags: <defaults>
</compile_context>

<pallas_src>
import math

import jax
import jax.numpy as jnp
from jax.experimental import pallas as pl
from jax.experimental.pallas import tpu as pltpu

SEQ_LEN = 90  # length of the registered `pe` buffer in the module


def _pos_embed_kernel(x_ref, w_ref, pe_ref, o_ref):
    # x_ref : (TB, S_pad, F)  TB batches of input rows for this grid step
    # w_ref : (F, D)          linear weight (in, out), VMEM-resident
    # pe_ref: (S_pad, D)      positional encoding with bias pre-folded, resident
    # o_ref : (TB, S_pad, D)  output tile
    tb = x_ref.shape[0]
    w = w_ref[...]
    pe = pe_ref[...]
    for b in range(tb):  # short static unroll; each dot runs on the MXU
        y = jnp.dot(x_ref[b], w, preferred_element_type=jnp.float32)
        o_ref[b] = (y + pe).astype(o_ref.dtype)  # fused VPU epilogue


def make_pe_table(d_model: int, seq_len: int = SEQ_LEN) -> jax.Array:
    """Sinusoidal table identical to the module's registered buffer (f32).

    Note: the module uses math.log(1000.0) (not the canonical 10000.0); we
    match the module.
    """
    position = jnp.arange(seq_len, dtype=jnp.float32)[:, None]                # (S, 1)
    div_term = jnp.exp(
        jnp.arange(0, d_model, 2, dtype=jnp.float32) * (-math.log(1000.0) / d_model)
    )                                                                          # (D/2,)
    pe = jnp.zeros((seq_len, d_model), jnp.float32)
    pe = pe.at[:, 0::2].set(jnp.sin(position * div_term))
    pe = pe.at[:, 1::2].set(jnp.cos(position * div_term))
    return pe


def _choose_tb(batch: int, s_pad: int, target_rows: int = 512) -> int:
    """Batches per grid step: ~target_rows rows/step, divisor of B, >=2 steps."""
    tb = max(1, min(batch, target_rows // max(s_pad, 1)))
    while batch % tb != 0:
        tb -= 1
    # Keep at least 2 grid steps so v7x can shard across both TensorCores.
    if batch // tb < 2 and batch >= 2:
        tb = batch // 2
        while tb > 1 and batch % tb != 0:
            tb -= 1
    return max(tb, 1)


def position_embedding(x, weight, bias, pe):
    """x: (B, S, F) f32; weight: (D, F) torch layout; bias: (D,); pe: (SEQ_LEN, D)."""
    B, S, F = x.shape
    D = weight.shape[0]
    assert S <= pe.shape[0], "sequence longer than registered pe buffer"

    # Pad seq dim to a multiple of 8 (90 -> 96 for the module's SEQ_LEN) so the
    # (8, 128) sublane constraint holds without per-step masking.
    S_pad = ((S + 7) // 8) * 8

    x_f32 = x.astype(jnp.float32)
    if S_pad != S:
        x_f32 = jnp.pad(x_f32, ((0, 0), (0, S_pad - S), (0, 0)))

    w_t = weight.astype(jnp.float32).T                       # (F, D), MXU orientation
    # Fold bias into the pe table once (tiny one-time precompute, not a
    # per-element pre-scale of activations).
    pe_b = pe[:S].astype(jnp.float32) + bias.astype(jnp.float32)[None, :]
    if S_pad != S:
        pe_b = jnp.pad(pe_b, ((0, S_pad - S), (0, 0)))

    tb = _choose_tb(B, S_pad)
    grid = (B // tb,)

    out = pl.pallas_call(
        _pos_embed_kernel,
        out_shape=jax.ShapeDtypeStruct((B, S_pad, D), jnp.float32),
        grid_spec=pltpu.PrefetchScalarGridSpec(
            num_scalar_prefetch=0,
            grid=grid,
            in_specs=[
                pl.BlockSpec((tb, S_pad, F), lambda i: (i, 0, 0)),   # x batch tile
                pl.BlockSpec((F, D), lambda i: (0, 0)),              # weight (resident)
                pl.BlockSpec((S_pad, D), lambda i: (0, 0)),          # pe+bias (resident)
            ],
            out_specs=pl.BlockSpec((tb, S_pad, D), lambda i: (i, 0, 0)),
        ),
        compiler_params=pltpu.CompilerParams(
            dimension_semantics=("parallel",),
        ),
    )(x_f32, w_t, pe_b)

    if S_pad != S:
        out = out[:, :S, :]
    return out


def _position_embedding_ref(x, weight, bias, pe):
    S = x.shape[1]
    y = jnp.einsum("bsf,df->bsd", x.astype(jnp.float32), weight.astype(jnp.float32))
    return y + bias.astype(jnp.float32)[None, None, :] + pe[None, :S, :]


if __name__ == "__main__":
    key = jax.random.PRNGKey(0)
    k_x, k_w, k_b = jax.random.split(key, 3)

    # small shapes consistent with the module's forward
    B, S, FEATURE_NUM, D_MODEL = 2, 8, 16, 32

    x = jax.random.normal(k_x, (B, S, FEATURE_NUM), jnp.float32)
    weight = 0.1 * jax.random.normal(k_w, (D_MODEL, FEATURE_NUM), jnp.float32)  # torch layout (out, in)
    bias = 0.1 * jax.random.normal(k_b, (D_MODEL,), jnp.float32)
    pe = make_pe_table(D_MODEL)

    out = position_embedding(x, weight, bias, pe)
    out = jax.block_until_ready(out)

    ref = _position_embedding_ref(x, weight, bias, pe)
    assert out.shape == (B, S, D_MODEL)
    assert jnp.allclose(out, ref, rtol=1e-5, atol=1e-5), float(jnp.max(jnp.abs(out - ref)))
    print("KERNEL_OK")
</pallas_src>

<mosaic_0001>
module attributes {stable_mosaic.version = 11 : i64} {
  func.func @_pos_embed_kernel(%arg0: i32, %arg1: memref<1x8x16xf32, #tpu.memory_space<vmem>>, %arg2: memref<16x32xf32, #tpu.memory_space<vmem>>, %arg3: memref<8x32xf32, #tpu.memory_space<vmem>>, %arg4: memref<1x8x32xf32, #tpu.memory_space<vmem>>) attributes {dimension_semantics = [#tpu.dimension_semantics<parallel>], iteration_bounds = array<i64: 2>, scalar_prefetch = 0 : i64, scratch_operands = 0 : i64, tpu.core_type = #tpu.core_type<tc>, window_params = [{transform_indices = @transform_0, window_bounds = array<i64: 1, 8, 16>}, {pipeline_mode = #tpu.pipeline_mode<synchronous>, transform_indices = @transform_1, window_bounds = array<i64: 16, 32>}, {pipeline_mode = #tpu.pipeline_mode<synchronous>, transform_indices = @transform_2, window_bounds = array<i64: 8, 32>}, {transform_indices = @transform_3, window_bounds = array<i64: 1, 8, 32>}]} {
    %c0 = arith.constant 0 : index
    %c0_0 = arith.constant 0 : index
    %0 = vector.load %arg2[%c0, %c0_0] : memref<16x32xf32, #tpu.memory_space<vmem>>, vector<16x32xf32>
    %c0_1 = arith.constant 0 : index
    %c0_2 = arith.constant 0 : index
    %1 = vector.load %arg3[%c0_1, %c0_2] : memref<8x32xf32, #tpu.memory_space<vmem>>, vector<8x32xf32>
    %c0_3 = arith.constant 0 : index
    %c0_4 = arith.constant 0 : index
    %c0_5 = arith.constant 0 : index
    %2 = vector.load %arg1[%c0_3, %c0_4, %c0_5] : memref<1x8x16xf32, #tpu.memory_space<vmem>>, vector<1x8x16xf32>
    %3 = vector.shape_cast %2 : vector<1x8x16xf32> to vector<8x16xf32>
    %cst = arith.constant dense<0.000000e+00> : vector<8x32xf32>
    %4 = tpu.matmul %3, %0, %cst {dimension_numbers = #tpu.dot_dimension_numbers<[1], [0], [0], [1], [0, 0, 1, 1], [], []>} : vector<8x16xf32>, vector<16x32xf32>, vector<8x32xf32> -> vector<8x32xf32>
    %5 = arith.addf %4, %1 : vector<8x32xf32>
    %c0_6 = arith.constant 0 : index
    %c0_7 = arith.constant 0 : index
    %c0_8 = arith.constant 0 : index
    %6 = vector.load %arg4[%c0_6, %c0_7, %c0_8] : memref<1x8x32xf32, #tpu.memory_space<vmem>>, vector<1x8x32xf32>
    %7 = vector.shape_cast %6 : vector<1x8x32xf32> to vector<8x32xf32>
    %8 = vector.shape_cast %5 : vector<8x32xf32> to vector<1x8x32xf32>
    tpu.vector_store %arg4[%c0_6, %c0_7, %c0_8], %8 {strides = array<i32>} : memref<1x8x32xf32, #tpu.memory_space<vmem>>, vector<1x8x32xf32>,
    return
  }
  func.func @transform_0(%arg0: i32) -> (i32, i32, i32) {
    %c0_i32 = arith.constant 0 : i32
    %c0_i32_0 = arith.constant 0 : i32
    %c0_i32_1 = arith.constant 0 : i32
    return %arg0, %c0_i32, %c0_i32_0 : i32, i32, i32
  }
  func.func @transform_1(%arg0: i32) -> (i32, i32) {
    %c0_i32 = arith.constant 0 : i32
    %c0_i32_0 = arith.constant 0 : i32
    %c0_i32_1 = arith.constant 0 : i32
    return %c0_i32, %c0_i32_0 : i32, i32
  }
  func.func @transform_2(%arg0: i32) -> (i32, i32) {
    %c0_i32 = arith.constant 0 : i32
    %c0_i32_0 = arith.constant 0 : i32
    %c0_i32_1 = arith.constant 0 : i32
    return %c0_i32, %c0_i32_0 : i32, i32
  }
  func.func @transform_3(%arg0: i32) -> (i32, i32, i32) {
    %c0_i32 = arith.constant 0 : i32
    %c0_i32_0 = arith.constant 0 : i32
    %c0_i32_1 = arith.constant 0 : i32
    return %arg0, %c0_i32, %c0_i32_0 : i32, i32, i32
  }
}

</mosaic_0001>

<llo_original>
// kernel: tpu_custom_call.1
$region0: #{tpu_custom_call.1}
  #allocation0 [shape = 'u32[]', space=smem, size = 0x4, offset = 0x4, fixed_abs, tag = 'smem constant byte address 0x4 - core index']
  #allocation1 [shape = 'u32[72,128]{1,0:T(1,128)}', space=vmem, size = 0x9000, scoped, tag = 'internal scratch']
  %s0 = inlined_call_operand.hbm [shape: f32[2,8,16], index: 0, kind: input, shape index: {}]
  %s1 = inlined_call_operand.hbm [shape: f32[16,32], index: 1, kind: input, shape index: {}]
  %s2 = inlined_call_operand.hbm [shape: f32[8,32], index: 2, kind: input, shape index: {}]
  %s3 = inlined_call_operand.hbm [shape: f32[2,8,32], index: 3, kind: output, shape index: {}]
  %s4 = sld [smem:[#allocation0]]
  $region57: #{tpu_custom_call.1} parent=0
    _
  %s6 = ssub.s32 1, %s4
  %s7 = scalar_select 0, %s6, %s4
  $region1: #{tpu_custom_call.1} parent=0
    #allocation2 [shape = 'u8[8192]{0}', space=vmem, size = 0x2000, scoped, tag = 'input window, operand 0']
    #allocation3 [shape = 's32[2]{0}', space=sflag, size = 0x8, scoped, tag = 'scoped memory for tpu_custom_call.1']
    #allocation4 [shape = 's32[2]{0}', space=sflag, size = 0x8, scoped, tag = 'scoped memory for tpu_custom_call.1']
    #allocation5 [shape = 'u8[8192]{0}', space=vmem, size = 0x2000, scoped, tag = 'input window, operand 1, single buffered']
    #allocation6 [shape = 's32[1]{0}', space=sflag, size = 0x4, scoped, tag = 'scoped memory for tpu_custom_call.1']
    #allocation7 [shape = 'u8[4096]{0}', space=vmem, size = 0x1000, scoped, tag = 'input window, operand 2, single buffered']
    #allocation8 [shape = 'u8[8192]{0}', space=vmem, size = 0x2000, scoped, tag = 'output window, operand 0']
    %8 = vsyncpa [#allocation3], 0
    %s9 = scalar_lea.sflag [#allocation3], 1
    %10 = vsyncpa %s9, 0
    %11 = vsyncpa [#allocation6], 0
    %12 = vsyncpa [#allocation4], 0
    %s13 = scalar_lea.sflag [#allocation4], 1
    %14 = vsyncpa %s13, 0
    loop: start=0, step=1, limit=4
    $region2: #{tpu_custom_call.1} parent=1 // loop_pre_header
      _
    $region3: #{tpu_custom_call.1} parent=1 // loop_header
      %s16 = sphi 0, %s20
      %p17 = scmp.ge.s32.totalorder %s16, 4
      %s26 = sphi 0, %s28
      %s29 = sphi 0, %s26
      %s30 = sphi 0, %s29
      %s46 = sphi 0, %s30
      %s50 = sphi 0, %s50
      %s52 = sphi 0, %s50
      %s53 = sphi 0, %s52
      %s67 = sphi 0, %s53
      %s71 = sphi 0, %s71
      %s73 = sphi 0, %s71
      %s74 = sphi 0, %s73
      %s88 = sphi 0, %s74
      %s94 = sphi 0, %s96
      %s97 = sphi 0, %s94
      %s98 = sphi 0, %s97
      %s114 = sphi 0, %s98
    $region4: #{tpu_custom_call.1} parent=1 // loop_header_branch
      %19 = sbr.rel (%p17) target = $region8
    $region5: #{tpu_custom_call.1} parent=1 // loop_body
      %s21 = ssub.s32 %s16, 1
      %s22 = ssub.s32 %s16, 2
      %s23 = sadd.s32 %s16, 1
      %s24 = ssub.s32 %s16, %s23
      %p25 = scmp.eq.s32.totalorder %s24, 0
      %s27 = sadd.s32 %s26, 1
      %s28 = scalar_select %p25, %s26, %s27
      %p31 = pneg %p25
      %p32 = scmp.eq.s32.totalorder %s16, 1
      %p33 = por %p31, %p32
      %p34 = scmp.ne.s32.totalorder %s26, %s29
      %p35 = scmp.eq.s32.totalorder %s16, 0
      %p36 = por %p34, %p35
      %p37 = scmp.ne.s32.totalorder %s26, %s29
      %p38 = scmp.eq.s32.totalorder %s21, 1
      %p39 = por %p37, %p38
      %p40 = scmp.ne.s32.totalorder %s29, %s30
      %p41 = scmp.eq.s32.totalorder %s21, 0
      %p42 = por %p40, %p41
      %p43 = scmp.ne.s32.totalorder %s29, %s30
      %p44 = scmp.eq.s32.totalorder %s22, 1
      %p45 = por %p43, %p44
      %p47 = scmp.ne.s32.totalorder %s30, %s46
      %p48 = scmp.eq.s32.totalorder %s22, 0
      %p49 = por %p47, %p48
      %s51 = sadd.s32 %s50, 1
      %p54 = scmp.eq.s32.totalorder %s16, 1
      %p55 = scmp.ne.s32.totalorder %s50, %s52
      %p56 = scmp.eq.s32.totalorder %s16, 0
      %p57 = por %p55, %p56
      %p58 = scmp.ne.s32.totalorder %s50, %s52
      %p59 = scmp.eq.s32.totalorder %s21, 1
      %p60 = por %p58, %p59
      %p61 = scmp.ne.s32.totalorder %s52, %s53
      %p62 = scmp.eq.s32.totalorder %s21, 0
      %p63 = por %p61, %p62
      %p64 = scmp.ne.s32.totalorder %s52, %s53
      %p65 = scmp.eq.s32.totalorder %s22, 1
      %p66 = por %p64, %p65
      %p68 = scmp.ne.s32.totalorder %s53, %s67
      %p69 = scmp.eq.s32.totalorder %s22, 0
      %p70 = por %p68, %p69
      %s72 = sadd.s32 %s71, 1
      %p75 = scmp.eq.s32.totalorder %s16, 1
      %p76 = scmp.ne.s32.totalorder %s71, %s73
      %p77 = scmp.eq.s32.totalorder %s16, 0
      %p78 = por %p76, %p77
      %p79 = scmp.ne.s32.totalorder %s71, %s73
      %p80 = scmp.eq.s32.totalorder %s21, 1
      %p81 = por %p79, %p80
      %p82 = scmp.ne.s32.totalorder %s73, %s74
      %p83 = scmp.eq.s32.totalorder %s21, 0
      %p84 = por %p82, %p83
      %p85 = scmp.ne.s32.totalorder %s73, %s74
      %p86 = scmp.eq.s32.totalorder %s22, 1
      %p87 = por %p85, %p86
      %p89 = scmp.ne.s32.totalorder %s74, %s88
      %p90 = scmp.eq.s32.totalorder %s22, 0
      %p91 = por %p89, %p90
      %s92 = ssub.s32 %s16, %s23
      %p93 = scmp.eq.s32.totalorder %s92, 0
      %s95 = sadd.s32 %s94, 1
      %s96 = scalar_select %p93, %s94, %s95
      %p99 = pneg %p93
      %p100 = scmp.eq.s32.totalorder %s16, 1
      %p101 = por %p99, %p100
      %p102 = scmp.ne.s32.totalorder %s94, %s97
      %p103 = scmp.eq.s32.totalorder %s16, 0
      %p104 = por %p102, %p103
      %p105 = scmp.ne.s32.totalorder %s94, %s97
      %p106 = scmp.eq.s32.totalorder %s21, 1
      %p107 = por %p105, %p106
      %p108 = scmp.ne.s32.totalorder %s97, %s98
      %p109 = scmp.eq.s32.totalorder %s21, 0
      %p110 = por %p108, %p109
      %p111 = scmp.ne.s32.totalorder %s97, %s98
      %p112 = scmp.eq.s32.totalorder %s22, 1
      %p113 = por %p111, %p112
      %p115 = scmp.ne.s32.totalorder %s98, %s114
      %p116 = scmp.eq.s32.totalorder %s22, 0
      %p117 = por %p115, %p116
      %p118 = scmp.le.s32.totalorder 1, %s16
      %p119 = scmp.lt.s32.totalorder %s16, 3
      %p120 = pnand %p118, %p119
      %p121 = pneg %p120
      // Predicated region
      $region9: #{tpu_custom_call.1} parent=5 // pred_check
        _
      $region10: #{tpu_custom_call.1} parent=5 // pred_check_branch
        %123 = sbr.rel (%p120) target = $region12
      $region11: #{tpu_custom_call.1} parent=5 // pred_region
        %s124 = ssub.s32 %s16, 1
        // Predicated region
        $region13: #{tpu_custom_call.1} parent=11 // pred_check
          %p125 = pneg %p63
        $region14: #{tpu_custom_call.1} parent=11 // pred_check_branch
          %127 = sbr.rel (%p125) target = $region16
        $region15: #{tpu_custom_call.1} parent=11 // pred_region
          %129 = vsyncadd [#allocation6], 0
          %s130 = sshll.u32 %s1, 4
          %s131 = int_to_ptr.hbm [resolvable:$true] %s130
          %s132 = sshll.u32 [#allocation5], 4
          %s133 = int_to_ptr.vmem [resolvable:$true] %s132
          %138 = dma.hbm_to_vmem [thread:$0]  %s131, 256, %s133, [#allocation6], 128, 128, 8
        $region16: #{tpu_custom_call.1} parent=11 // pred_fallthru
          _
        // Predicated region
        $region17: #{tpu_custom_call.1} parent=11 // pred_check
          %p139 = pneg %p84
        $region18: #{tpu_custom_call.1} parent=11 // pred_check_branch
          %141 = sbr.rel (%p139) target = $region20
        $region19: #{tpu_custom_call.1} parent=11 // pred_region
          %143 = vsyncadd [#allocation6], 0
          %s145 = sshll.u32 %s2, 4
          %s146 = int_to_ptr.hbm [resolvable:$true] %s145
          %s147 = sshll.u32 [#allocation7], 4
          %s148 = int_to_ptr.vmem [resolvable:$true] %s147
          %150 = dma.hbm_to_vmem [thread:$0]  %s146, 128, %s148, [#allocation6]
        $region20: #{tpu_custom_call.1} parent=11 // pred_fallthru
          _
      $region12: #{tpu_custom_call.1} parent=5 // pred_fallthru
        _
      %p151 = scmp.lt.s32.totalorder %s16, 2
      // Predicated region
      $region21: #{tpu_custom_call.1} parent=5 // pred_check
        %p152 = pneg %p151
      $region22: #{tpu_custom_call.1} parent=5 // pred_check_branch
        %154 = sbr.rel (%p152) target = $region24
      $region23: #{tpu_custom_call.1} parent=5 // pred_region
        // Predicated region
        $region25: #{tpu_custom_call.1} parent=23 // pred_check
          %p155 = pneg %p36
        $region26: #{tpu_custom_call.1} parent=23 // pred_check_branch
          %157 = sbr.rel (%p155) target = $region28
        $region27: #{tpu_custom_call.1} parent=23 // pred_region
          %s158 = sand.u32 %s26, 1
          %s159 = scalar_lea.sflag [#allocation3], %s158
          %s160 = sand.u32 %s26, 1
          %s161 = smul.addr %s160, 8
          %s162 = scalar_lea.vmem [#allocation2], %s161
          %164 = vsyncadd %s159, 0
          %s165 = smul.addr %s16, 8
          %s166 = scalar_lea.hbm %s0, %s165
          %s168 = sshll.u32 %s166, 4
          %s169 = int_to_ptr.hbm [resolvable:$true] %s168
          %s170 = sshll.u32 %s162, 4
          %s171 = int_to_ptr.vmem [resolvable:$true] %s170
          %173 = dma.hbm_to_vmem [thread:$0]  %s169, 128, %s171, %s159
        $region28: #{tpu_custom_call.1} parent=23 // pred_fallthru
          _
      $region24: #{tpu_custom_call.1} parent=5 // pred_fallthru
        _
      %p174 = scmp.le.s32.totalorder 1, %s16
      %p175 = scmp.lt.s32.totalorder %s16, 3
      %p176 = pnand %p174, %p175
      %p177 = pneg %p176
      // Predicated region
      $region29: #{tpu_custom_call.1} parent=5 // pred_check
        _
      $region30: #{tpu_custom_call.1} parent=5 // pred_check_branch
        %179 = sbr.rel (%p176) target = $region32
      $region31: #{tpu_custom_call.1} parent=5 // pred_region
        %s180 = ssub.s32 %s16, 1
        %s181 = sand.u32 %s29, 1
        %s182 = scalar_lea.sflag [#allocation3], %s181
        %s183 = sand.u32 %s29, 1
        %s184 = smul.addr %s183, 8
        %s185 = scalar_lea.vmem [#allocation2], %s184
        // Predicated region
        $region33: #{tpu_custom_call.1} parent=31 // pred_check
          %p186 = pneg %p42
        $region34: #{tpu_custom_call.1} parent=31 // pred_check_branch
          %188 = sbr.rel (%p186) target = $region36
        $region35: #{tpu_custom_call.1} parent=31 // pred_region
          %190 = dma.done %s182, 128
        $region36: #{tpu_custom_call.1} parent=31 // pred_fallthru
          _
        // Predicated region
        $region37: #{tpu_custom_call.1} parent=31 // pred_check
          %p191 = pneg %p63
        $region38: #{tpu_custom_call.1} parent=31 // pred_check_branch
          %193 = sbr.rel (%p191) target = $region40
        $region39: #{tpu_custom_call.1} parent=31 // pred_region
          %195 = dma.done [#allocation6], 256
        $region40: #{tpu_custom_call.1} parent=31 // pred_fallthru
          _
        // Predicated region
        $region41: #{tpu_custom_call.1} parent=31 // pred_check
          %p196 = pneg %p84
        $region42: #{tpu_custom_call.1} parent=31 // pred_check_branch
          %198 = sbr.rel (%p196) target = $region44
        $region43: #{tpu_custom_call.1} parent=31 // pred_region
          %200 = dma.done [#allocation6], 128
        $region44: #{tpu_custom_call.1} parent=31 // pred_fallthru
          _
        %s201 = sand.u32 %s29, 1
        %s202 = scalar_lea.sflag [#allocation3], %s201
        %s203 = sand.u32 %s29, 1
        %s204 = smul.addr %s203, 8
        %s205 = scalar_lea.vmem [#allocation2], %s204
        %p206 = pneg %p42
        %p207 = pneg %p39
        %p208 = pneg %p63
        %p209 = pneg %p60
        %p210 = pneg %p84
        %p211 = pneg %p81
        %p212 = pneg %p110
        %p213 = pneg %p107
        %s214 = sand.u32 %s97, 1
        %s215 = scalar_lea.sflag [#allocation4], %s214
        %s216 = sand.u32 %s97, 1
        %s217 = smul.addr %s216, 8
        %s218 = scalar_lea.vmem [#allocation8], %s217
        %v219 = vld [vmem:[#allocation5] sm:$0xff]
        %v220 = vld [vmem:[#allocation5 + $0x8] sm:$0xff]
        %v221 = vld [vmem:[#allocation7] sm:$0xff]
        %v222 = vld [vmem:[%s185] sm:$0xff]
        %vm223 = vcmask 130048
        %v225 = vsel %vm223, %v222, 0
        %227 = vmatpush.msra.mxu0 0.0
        %228 = vmatpush.msra.mxu0 0.0
        %229 = vmatpush.msra.mxu0 0.0
        %230 = vmatpush.msra.mxu0 0.0
        %231 = vmatpush.msra.mxu0 0.0
        %232 = vmatpush.msra.mxu0 0.0
        %233 = vmatpush.msra.mxu0 0.0
        %234 = vmatpush.msra.mxu0 0.0
        %235 = vmatpush.msra.mxu0 0.0
        %236 = vmatpush.msra.mxu0 0.0
        %237 = vmatpush.msra.mxu0 0.0
        %238 = vmatpush.msra.mxu0 0.0
        %239 = vmatpush.msra.mxu0 0.0
        %240 = vmatpush.msra.mxu0 0.0
        %241 = vmatpush.msra.mxu0 %v220
        %242 = vmatpush.msra.mxu0 %v219
        %243 = vmatmul.f32.gmra.mxu0 %v225
        %v244 = vpop.f32.mrf.mxu0
        %v245 = vadd.f32 %v221, %v244
        %246 = vdwg.mxu0
        %vm247 = vcmask 261120
        %248 = vst.msk [vmem:[%s218] sm:$0xff] %vm247, %v245
        %s249 = sand.u32 %s97, 1
        %s250 = scalar_lea.sflag [#allocation4], %s249
        %s251 = sand.u32 %s97, 1
        %s252 = smul.addr %s251, 8
        %s253 = scalar_lea.vmem [#allocation8], %s252
        // Predicated region
        $region45: #{tpu_custom_call.1} parent=31 // pred_check
          %p254 = pneg %p107
        $region46: #{tpu_custom_call.1} parent=31 // pred_check_branch
          %256 = sbr.rel (%p254) target = $region48
        $region47: #{tpu_custom_call.1} parent=31 // pred_region
          %258 = vsyncadd %s250, 0
          %s259 = smul.addr %s21, 8
          %s260 = scalar_lea.hbm %s3, %s259
          %s262 = sshll.u32 %s253, 4
          %s263 = int_to_ptr.vmem [resolvable:$true] %s262
          %s264 = sshll.u32 %s260, 4
          %s265 = int_to_ptr.hbm [resolvable:$true] %s264
          %267 = dma.vmem_to_hbm [thread:$0]  %s263, 128, %s265, %s250
        $region48: #{tpu_custom_call.1} parent=31 // pred_fallthru
          _
      $region32: #{tpu_custom_call.1} parent=5 // pred_fallthru
        _
      %p268 = scmp.le.s32.totalorder 2, %s16
      // Predicated region
      $region49: #{tpu_custom_call.1} parent=5 // pred_check
        %p269 = pneg %p268
      $region50: #{tpu_custom_call.1} parent=5 // pred_check_branch
        %271 = sbr.rel (%p269) target = $region52
      $region51: #{tpu_custom_call.1} parent=5 // pred_region
        %s272 = ssub.s32 %s16, 2
        // Predicated region
        $region53: #{tpu_custom_call.1} parent=51 // pred_check
          %p273 = pneg %p113
        $region54: #{tpu_custom_call.1} parent=51 // pred_check_branch
          %275 = sbr.rel (%p273) target = $region56
        $region55: #{tpu_custom_call.1} parent=51 // pred_region
          %s276 = sand.u32 %s98, 1
          %s277 = scalar_lea.sflag [#allocation4], %s276
          %s278 = sand.u32 %s98, 1
          %s279 = smul.addr %s278, 8
          %s280 = scalar_lea.vmem [#allocation8], %s279
          %282 = dma.done %s277, 128
        $region56: #{tpu_custom_call.1} parent=51 // pred_fallthru
          _
      $region52: #{tpu_custom_call.1} parent=5 // pred_fallthru
        _
    $region6: #{tpu_custom_call.1} parent=1 // loop_footer
      %s20 = sadd.s32 1, %s16
    $region7: #{tpu_custom_call.1} parent=1 // loop_footer_branch
      %15 = sbr.rel target = $region3
    $region8: #{tpu_custom_call.1} parent=1 // loop_exit
      _
    %283 = vsyncpa [#allocation3], 1
    %s284 = scalar_lea.sflag [#allocation3], 1
    %285 = vsyncpa %s284, 1
    %286 = vsyncpa [#allocation6], 1
    %287 = vsyncpa [#allocation4], 1
    %s288 = scalar_lea.sflag [#allocation4], 1
    %289 = vsyncpa %s288, 1

</llo_original>
